<compile_context>
chip_gen: v5e
topology: v5e:2x2
jax: 0.10.0
libtpu: 0.0.40
codegen_flags: <defaults>
</compile_context>

<pallas_src>
import jax
import jax.numpy as jnp
from jax import lax
from jax.experimental import pallas as pl
from jax.experimental.pallas import tpu as pltpu

N_EMBD = 384          # matches the module's n_embd
BLOCK_SIZE = 256      # max context the PyTorch tril buffer supports; T <= this


def head_kernel(x_ref, wqkv_ref, bias_ref, o_ref):
    # x_ref:    (Bb, T, C) f32 block of Bb batch elements
    # wqkv_ref: (C, 3H) bf16 fused [Q*scale | K | V] weight (grid-invariant)
    # bias_ref: (T, T) f32 causal additive bias, 0 on/below diag, -inf above
    Bb, T, C = x_ref.shape
    H = o_ref.shape[-1]

    # Fused QKV projection: one (Bb*T, C) x (C, 3H) MXU pass with bf16
    # operands and an f32 accumulator.
    x2d = x_ref[...].reshape(Bb * T, C).astype(jnp.bfloat16)
    qkv = jnp.dot(x2d, wqkv_ref[...],
                  preferred_element_type=jnp.float32)            # (Bb*T, 3H) f32

    # Slices back to bf16 for the two attention matmuls (f32 accumulation kept).
    q = qkv[:, 0 * H:1 * H].reshape(Bb, T, H).astype(jnp.bfloat16)  # pre-scaled
    k = qkv[:, 1 * H:2 * H].reshape(Bb, T, H).astype(jnp.bfloat16)
    v = qkv[:, 2 * H:3 * H].reshape(Bb, T, H).astype(jnp.bfloat16)

    # Scores: contract the head dim of both operands directly (no k.T
    # materialization / XLU transpose on the critical path).
    wei = lax.dot_general(q, k, (((2,), (2,)), ((0,), (0,))),
                          preferred_element_type=jnp.float32)    # (Bb, T, T)

    # Causal mask (== masked_fill(tril[:T,:T] == 0, -inf)); grid-invariant bias
    # DMA'd once rather than rebuilt from iotas every step.  Every row keeps
    # its diagonal element, so -inf is safe for the softmax below.
    wei = wei + bias_ref[...][None]

    # Numerically-stable softmax in f32 with deferred normalization: keep the
    # (T,T) matrix unnormalized and scale the (Bb,T,H) output instead.
    m = jnp.max(wei, axis=-1, keepdims=True)
    p = jnp.exp(wei - m)                                         # (Bb, T, T) f32
    s = jnp.sum(p, axis=-1, keepdims=True)                       # (Bb, T, 1) f32

    # (attention-weight dropout: identity in eval mode)

    out = lax.dot_general(p.astype(jnp.bfloat16), v,
                          (((2,), (1,)), ((0,), (0,))),
                          preferred_element_type=jnp.float32)    # (Bb, T, H) f32
    out = out * pl.reciprocal(s, approx=True)                    # EUP slot
    o_ref[...] = out.astype(o_ref.dtype)


def make_fused_qkv_weight(wq, wk, wv):
    """Fold the C**-0.5 score scale into Q and fuse Q/K/V into one (C, 3H)
    bf16 weight.  Done ONCE at weight-load time, not per forward call."""
    C = wq.shape[0]
    scale = jnp.float32(C) ** -0.5
    w_qkv = jnp.concatenate(
        [wq.astype(jnp.float32) * scale,
         wk.astype(jnp.float32),
         wv.astype(jnp.float32)], axis=1)                        # (C, 3H)
    return w_qkv.astype(jnp.bfloat16)


def _pick_block_batch(B, T, target_rows=1024):
    """Largest divisor of B with bb*T <= target_rows, capped at B//2 (when
    B >= 2) so the parallel grid has at least two steps."""
    bb_cap = max(1, target_rows // T)
    if B >= 2:
        bb_cap = min(bb_cap, B // 2)
    for cand in range(max(1, min(B, bb_cap)), 0, -1):
        if B % cand == 0:
            return cand
    return 1


@jax.jit
def head_forward(x, w_qkv):
    """x: (B, T, C) float32; w_qkv: (C, 3H) bf16 fused weight from
    make_fused_qkv_weight."""
    B, T, C = x.shape
    H = w_qkv.shape[1] // 3

    bb = _pick_block_batch(B, T)

    # Grid-invariant causal additive bias (built once per compile).
    row = lax.broadcasted_iota(jnp.int32, (T, T), 0)
    col = lax.broadcasted_iota(jnp.int32, (T, T), 1)
    bias = jnp.where(col <= row, 0.0, -jnp.inf).astype(jnp.float32)

    return pl.pallas_call(
        head_kernel,
        out_shape=jax.ShapeDtypeStruct((B, T, H), jnp.float32),
        grid=(B // bb,),
        in_specs=[
            pl.BlockSpec((bb, T, C), lambda b: (b, 0, 0)),
            pl.BlockSpec((C, 3 * H), lambda b: (0, 0)),   # constant block index
            pl.BlockSpec((T, T), lambda b: (0, 0)),       # constant block index
        ],
        out_specs=pl.BlockSpec((bb, T, H), lambda b: (b, 0, 0)),
        compiler_params=pltpu.CompilerParams(
            dimension_semantics=("parallel",),
            # Explicit scoped-VMEM headroom so larger bb also fits v5e's
            # smaller (16 MiB) default; well under every generation's physical
            # VMEM.
            vmem_limit_bytes=32 * 1024 * 1024),
    )(x, w_qkv, bias)


def head_reference(x, wq, wk, wv):
    """Pure-JAX f32 reference mirroring the PyTorch forward (eval mode)."""
    B, T, C = x.shape
    q = x @ wq
    k = x @ wk
    v = x @ wv
    wei = jnp.einsum("bth,bsh->bts", q, k) * C ** (-0.5)
    mask = jnp.tril(jnp.ones((T, T), dtype=bool))
    wei = jnp.where(mask[None], wei, -jnp.inf)
    wei = jax.nn.softmax(wei, axis=-1)
    return jnp.einsum("bts,bsh->bth", wei, v)


if __name__ == "__main__":
    B, T, C = 4, 64, N_EMBD      # T <= BLOCK_SIZE
    HEAD_SIZE = 64

    key = jax.random.PRNGKey(0)
    kx, kq, kk, kv = jax.random.split(key, 4)

    x = jax.random.normal(kx, (B, T, C), dtype=jnp.float32)

    # nn.Linear(n_embd, head_size, bias=False) default init:
    # U(-1/sqrt(C), 1/sqrt(C)), stored here already transposed to (C, H).
    bound = 1.0 / (C ** 0.5)
    wq = jax.random.uniform(kq, (C, HEAD_SIZE), jnp.float32, -bound, bound)
    wk = jax.random.uniform(kk, (C, HEAD_SIZE), jnp.float32, -bound, bound)
    wv = jax.random.uniform(kv, (C, HEAD_SIZE), jnp.float32, -bound, bound)

    # Fused bf16 weight is prepared once (weight-load time), not per forward.
    w_qkv = make_fused_qkv_weight(wq, wk, wv)

    out = head_forward(x, w_qkv)
    out = jax.block_until_ready(out)

    ref = head_reference(x, wq, wk, wv)
    assert out.shape == (B, T, HEAD_SIZE)
    # Tolerance accounts for bf16 MXU operands and the EUP approximate
    # reciprocal used for the deferred softmax normalization.
    assert jnp.allclose(out, ref, atol=3e-2, rtol=3e-2), "mismatch vs reference"

    print("KERNEL_OK")
</pallas_src>

<mosaic_0001>
module attributes {stable_mosaic.version = 11 : i64} {
  func.func @head_kernel(%arg0: i32, %arg1: memref<2x64x384xf32, #tpu.memory_space<vmem>>, %arg2: memref<384x192xbf16, #tpu.memory_space<vmem>>, %arg3: memref<64x64xf32, #tpu.memory_space<vmem>>, %arg4: memref<2x64x64xf32, #tpu.memory_space<vmem>>) attributes {dimension_semantics = [#tpu.dimension_semantics<parallel>], iteration_bounds = array<i64: 2>, scalar_prefetch = 0 : i64, scratch_operands = 0 : i64, tpu.core_type = #tpu.core_type<tc>, window_params = [{transform_indices = @transform_0, window_bounds = array<i64: 2, 64, 384>}, {pipeline_mode = #tpu.pipeline_mode<synchronous>, transform_indices = @transform_1, window_bounds = array<i64: 384, 192>}, {pipeline_mode = #tpu.pipeline_mode<synchronous>, transform_indices = @transform_2, window_bounds = array<i64: 64, 64>}, {transform_indices = @transform_3, window_bounds = array<i64: 2, 64, 64>}]} {
    %c0 = arith.constant 0 : index
    %c0_0 = arith.constant 0 : index
    %c0_1 = arith.constant 0 : index
    %0 = vector.load %arg1[%c0, %c0_0, %c0_1] : memref<2x64x384xf32, #tpu.memory_space<vmem>>, vector<2x64x384xf32>
    %1 = vector.shape_cast %0 : vector<2x64x384xf32> to vector<128x384xf32>
    %2 = arith.truncf %1 : vector<128x384xf32> to vector<128x384xbf16>
    %c0_2 = arith.constant 0 : index
    %c0_3 = arith.constant 0 : index
    %3 = vector.load %arg2[%c0_2, %c0_3] : memref<384x192xbf16, #tpu.memory_space<vmem>>, vector<384x192xbf16>
    %cst = arith.constant dense<0.000000e+00> : vector<128x192xf32>
    %4 = tpu.matmul %2, %3, %cst {dimension_numbers = #tpu.dot_dimension_numbers<[1], [0], [0], [1], [0, 0, 1, 1], [], []>} : vector<128x384xbf16>, vector<384x192xbf16>, vector<128x192xf32> -> vector<128x192xf32>
    %5 = vector.extract_strided_slice %4 {offsets = [0, 0], sizes = [128, 64], strides = [1, 1]} : vector<128x192xf32> to vector<128x64xf32>
    %6 = vector.shape_cast %5 : vector<128x64xf32> to vector<2x64x64xf32>
    %7 = arith.truncf %6 : vector<2x64x64xf32> to vector<2x64x64xbf16>
    %8 = vector.extract_strided_slice %4 {offsets = [0, 64], sizes = [128, 64], strides = [1, 1]} : vector<128x192xf32> to vector<128x64xf32>
    %9 = vector.shape_cast %8 : vector<128x64xf32> to vector<2x64x64xf32>
    %10 = arith.truncf %9 : vector<2x64x64xf32> to vector<2x64x64xbf16>
    %11 = vector.extract_strided_slice %4 {offsets = [0, 128], sizes = [128, 64], strides = [1, 1]} : vector<128x192xf32> to vector<128x64xf32>
    %12 = vector.shape_cast %11 : vector<128x64xf32> to vector<2x64x64xf32>
    %13 = arith.truncf %12 : vector<2x64x64xf32> to vector<2x64x64xbf16>
    %cst_4 = arith.constant dense<0.000000e+00> : vector<2x64x64xf32>
    %14 = tpu.matmul %7, %10, %cst_4 {dimension_numbers = #tpu.dot_dimension_numbers<[2], [2], [1], [1], [0, 0, 0, 1, 1, 1], [0], [0]>} : vector<2x64x64xbf16>, vector<2x64x64xbf16>, vector<2x64x64xf32> -> vector<2x64x64xf32>
    %c0_5 = arith.constant 0 : index
    %c0_6 = arith.constant 0 : index
    %15 = vector.load %arg3[%c0_5, %c0_6] : memref<64x64xf32, #tpu.memory_space<vmem>>, vector<64x64xf32>
    %16 = vector.shape_cast %15 : vector<64x64xf32> to vector<1x64x64xf32>
    %17 = vector.broadcast %16 : vector<1x64x64xf32> to vector<2x64x64xf32>
    %18 = arith.addf %14, %17 : vector<2x64x64xf32>
    %cst_7 = arith.constant dense<0xFF800000> : vector<2x64xf32>
    %19 = vector.multi_reduction <maximumf>, %18, %cst_7 [2] : vector<2x64x64xf32> to vector<2x64xf32>
    %20 = vector.shape_cast %19 : vector<2x64xf32> to vector<2x64x1xf32>
    %21 = vector.broadcast %20 : vector<2x64x1xf32> to vector<2x64x64xf32>
    %22 = arith.subf %18, %21 : vector<2x64x64xf32>
    %23 = math.exp %22 : vector<2x64x64xf32>
    %cst_8 = arith.constant dense<0.000000e+00> : vector<2x64xf32>
    %24 = vector.multi_reduction <add>, %23, %cst_8 [2] : vector<2x64x64xf32> to vector<2x64xf32>
    %25 = vector.shape_cast %24 : vector<2x64xf32> to vector<2x64x1xf32>
    %26 = arith.truncf %23 : vector<2x64x64xf32> to vector<2x64x64xbf16>
    %cst_9 = arith.constant dense<0.000000e+00> : vector<2x64x64xf32>
    %27 = tpu.matmul %26, %13, %cst_9 {dimension_numbers = #tpu.dot_dimension_numbers<[2], [1], [1], [2], [0, 0, 0, 1, 1, 2], [0], [0]>} : vector<2x64x64xbf16>, vector<2x64x64xbf16>, vector<2x64x64xf32> -> vector<2x64x64xf32>
    %28 = tpu.reciprocal %25 {approx = true} : vector<2x64x1xf32> -> vector<2x64x1xf32>
    %29 = vector.broadcast %28 : vector<2x64x1xf32> to vector<2x64x64xf32>
    %30 = arith.mulf %27, %29 : vector<2x64x64xf32>
    %c0_10 = arith.constant 0 : index
    %c0_11 = arith.constant 0 : index
    %c0_12 = arith.constant 0 : index
    %31 = vector.load %arg4[%c0_10, %c0_11, %c0_12] : memref<2x64x64xf32, #tpu.memory_space<vmem>>, vector<2x64x64xf32>
    tpu.vector_store %arg4[%c0_10, %c0_11, %c0_12], %30 {strides = array<i32>} : memref<2x64x64xf32, #tpu.memory_space<vmem>>, vector<2x64x64xf32>,
    return
  }
  func.func @transform_0(%arg0: i32) -> (i32, i32, i32) {
    %c0_i32 = arith.constant 0 : i32
    %c0_i32_0 = arith.constant 0 : i32
    %c0_i32_1 = arith.constant 0 : i32
    return %arg0, %c0_i32, %c0_i32_0 : i32, i32, i32
  }
  func.func @transform_1(%arg0: i32) -> (i32, i32) {
    %c0_i32 = arith.constant 0 : i32
    %c0_i32_0 = arith.constant 0 : i32
    %c0_i32_1 = arith.constant 0 : i32
    return %c0_i32, %c0_i32_0 : i32, i32
  }
  func.func @transform_2(%arg0: i32) -> (i32, i32) {
    %c0_i32 = arith.constant 0 : i32
    %c0_i32_0 = arith.constant 0 : i32
    %c0_i32_1 = arith.constant 0 : i32
    return %c0_i32, %c0_i32_0 : i32, i32
  }
  func.func @transform_3(%arg0: i32) -> (i32, i32, i32) {
    %c0_i32 = arith.constant 0 : i32
    %c0_i32_0 = arith.constant 0 : i32
    %c0_i32_1 = arith.constant 0 : i32
    return %arg0, %c0_i32, %c0_i32_0 : i32, i32, i32
  }
}

</mosaic_0001>

<llo_original>
// kernel: head_forward.1
$region0: #{head_forward.1}
  #allocation0 [shape = 'u32[]', space=smem, size = 0x4, offset = 0x4, fixed_abs, tag = 'smem constant byte address 0x4 - core index']
  #allocation1 [shape = 'u32[72,128]{1,0:T(1,128)}', space=vmem, size = 0x9000, scoped, tag = 'internal scratch']
  %s0 = inlined_call_operand.hbm [shape: f32[4,64,384], index: 0, kind: input, shape index: {}]
  %s1 = inlined_call_operand.vmem [shape: bf16[384,192], index: 1, kind: input, shape index: {}]
  %s2 = inlined_call_operand.vmem [shape: f32[64,64], index: 2, kind: input, shape index: {}]
  %s3 = inlined_call_operand.hbm [shape: f32[4,64,64], index: 3, kind: output, shape index: {}]
  %s4 = sld [smem:[#allocation0]]
  $region49: #{head_forward.1} parent=0
    _
  %s6 = ssub.s32 1, %s4
  %s7 = scalar_select 0, %s6, %s4
  $region1: #{head_forward.1} parent=0
    #allocation2 [shape = 'u8[393216]{0}', space=vmem, size = 0x60000, scoped, tag = 'input window, operand 0']
    #allocation3 [shape = 's32[2]{0}', space=sflag, size = 0x8, scoped, tag = 'scoped memory for head_forward.1']
    #allocation4 [shape = 's32[2]{0}', space=sflag, size = 0x8, scoped, tag = 'scoped memory for head_forward.1']
    #allocation5 [shape = 'u8[131072]{0}', space=vmem, size = 0x20000, scoped, tag = 'output window, operand 0']
    %8 = vsyncpa [#allocation3], 0
    %s9 = scalar_lea.sflag [#allocation3], 1
    %10 = vsyncpa %s9, 0
    %11 = vsyncpa [#allocation4], 0
    %s12 = scalar_lea.sflag [#allocation4], 1
    %13 = vsyncpa %s12, 0
    loop: start=0, step=1, limit=4
    $region2: #{head_forward.1} parent=1 // loop_pre_header
      _
    $region3: #{head_forward.1} parent=1 // loop_header
      %s15 = sphi 0, %s19
      %p16 = scmp.ge.s32.totalorder %s15, 4
      %s25 = sphi 0, %s27
      %s28 = sphi 0, %s25
      %s29 = sphi 0, %s28
      %s45 = sphi 0, %s29
      %s49 = sphi 0, %s49
      %s51 = sphi 0, %s49
      %s52 = sphi 0, %s51
      %s66 = sphi 0, %s52
      %s70 = sphi 0, %s70
      %s72 = sphi 0, %s70
      %s73 = sphi 0, %s72
      %s87 = sphi 0, %s73
      %s93 = sphi 0, %s95
      %s96 = sphi 0, %s93
      %s97 = sphi 0, %s96
      %s113 = sphi 0, %s97
    $region4: #{head_forward.1} parent=1 // loop_header_branch
      %18 = sbr.rel (%p16) target = $region8
    $region5: #{head_forward.1} parent=1 // loop_body
      %s20 = ssub.s32 %s15, 1
      %s21 = ssub.s32 %s15, 2
      %s22 = sadd.s32 %s15, 1
      %s23 = ssub.s32 %s15, %s22
      %p24 = scmp.eq.s32.totalorder %s23, 0
      %s26 = sadd.s32 %s25, 1
      %s27 = scalar_select %p24, %s25, %s26
      %p30 = pneg %p24
      %p31 = scmp.eq.s32.totalorder %s15, 1
      %p32 = por %p30, %p31
      %p33 = scmp.ne.s32.totalorder %s25, %s28
      %p34 = scmp.eq.s32.totalorder %s15, 0
      %p35 = por %p33, %p34
      %p36 = scmp.ne.s32.totalorder %s25, %s28
      %p37 = scmp.eq.s32.totalorder %s20, 1
      %p38 = por %p36, %p37
      %p39 = scmp.ne.s32.totalorder %s28, %s29
      %p40 = scmp.eq.s32.totalorder %s20, 0
      %p41 = por %p39, %p40
      %p42 = scmp.ne.s32.totalorder %s28, %s29
      %p43 = scmp.eq.s32.totalorder %s21, 1
      %p44 = por %p42, %p43
      %p46 = scmp.ne.s32.totalorder %s29, %s45
      %p47 = scmp.eq.s32.totalorder %s21, 0
      %p48 = por %p46, %p47
      %s50 = sadd.s32 %s49, 1
      %p53 = scmp.eq.s32.totalorder %s15, 1
      %p54 = scmp.ne.s32.totalorder %s49, %s51
      %p55 = scmp.eq.s32.totalorder %s15, 0
      %p56 = por %p54, %p55
      %p57 = scmp.ne.s32.totalorder %s49, %s51
      %p58 = scmp.eq.s32.totalorder %s20, 1
      %p59 = por %p57, %p58
      %p60 = scmp.ne.s32.totalorder %s51, %s52
      %p61 = scmp.eq.s32.totalorder %s20, 0
      %p62 = por %p60, %p61
      %p63 = scmp.ne.s32.totalorder %s51, %s52
      %p64 = scmp.eq.s32.totalorder %s21, 1
      %p65 = por %p63, %p64
      %p67 = scmp.ne.s32.totalorder %s52, %s66
      %p68 = scmp.eq.s32.totalorder %s21, 0
      %p69 = por %p67, %p68
      %s71 = sadd.s32 %s70, 1
      %p74 = scmp.eq.s32.totalorder %s15, 1
      %p75 = scmp.ne.s32.totalorder %s70, %s72
      %p76 = scmp.eq.s32.totalorder %s15, 0
      %p77 = por %p75, %p76
      %p78 = scmp.ne.s32.totalorder %s70, %s72
      %p79 = scmp.eq.s32.totalorder %s20, 1
      %p80 = por %p78, %p79
      %p81 = scmp.ne.s32.totalorder %s72, %s73
      %p82 = scmp.eq.s32.totalorder %s20, 0
      %p83 = por %p81, %p82
      %p84 = scmp.ne.s32.totalorder %s72, %s73
      %p85 = scmp.eq.s32.totalorder %s21, 1
      %p86 = por %p84, %p85
      %p88 = scmp.ne.s32.totalorder %s73, %s87
      %p89 = scmp.eq.s32.totalorder %s21, 0
      %p90 = por %p88, %p89
      %s91 = ssub.s32 %s15, %s22
      %p92 = scmp.eq.s32.totalorder %s91, 0
      %s94 = sadd.s32 %s93, 1
      %s95 = scalar_select %p92, %s93, %s94
      %p98 = pneg %p92
      %p99 = scmp.eq.s32.totalorder %s15, 1
      %p100 = por %p98, %p99
      %p101 = scmp.ne.s32.totalorder %s93, %s96
      %p102 = scmp.eq.s32.totalorder %s15, 0
      %p103 = por %p101, %p102
      %p104 = scmp.ne.s32.totalorder %s93, %s96
      %p105 = scmp.eq.s32.totalorder %s20, 1
      %p106 = por %p104, %p105
      %p107 = scmp.ne.s32.totalorder %s96, %s97
      %p108 = scmp.eq.s32.totalorder %s20, 0
      %p109 = por %p107, %p108
      %p110 = scmp.ne.s32.totalorder %s96, %s97
      %p111 = scmp.eq.s32.totalorder %s21, 1
      %p112 = por %p110, %p111
      %p114 = scmp.ne.s32.totalorder %s97, %s113
      %p115 = scmp.eq.s32.totalorder %s21, 0
      %p116 = por %p114, %p115
      %p117 = scmp.le.s32.totalorder 1, %s15
      %p118 = scmp.lt.s32.totalorder %s15, 3
      %p119 = pnand %p117, %p118
      %p120 = pneg %p119
      // Predicated region
      $region9: #{head_forward.1} parent=5 // pred_check
        _
      $region10: #{head_forward.1} parent=5 // pred_check_branch
        %122 = sbr.rel (%p119) target = $region12
      $region11: #{head_forward.1} parent=5 // pred_region
        %s123 = ssub.s32 %s15, 1
        // Predicated region
        $region13: #{head_forward.1} parent=11 // pred_check
          %p124 = pneg %p62
        $region14: #{head_forward.1} parent=11 // pred_check_branch
          %126 = sbr.rel (%p124) target = $region16
        $region15: #{head_forward.1} parent=11 // pred_region
          _
        $region16: #{head_forward.1} parent=11 // pred_fallthru
          _
        // Predicated region
        $region17: #{head_forward.1} parent=11 // pred_check
          %p127 = pneg %p83
        $region18: #{head_forward.1} parent=11 // pred_check_branch
          %129 = sbr.rel (%p127) target = $region20
        $region19: #{head_forward.1} parent=11 // pred_region
          _
        $region20: #{head_forward.1} parent=11 // pred_fallthru
          _
      $region12: #{head_forward.1} parent=5 // pred_fallthru
        _
      %p130 = scmp.lt.s32.totalorder %s15, 2
      // Predicated region
      $region21: #{head_forward.1} parent=5 // pred_check
        %p131 = pneg %p130
      $region22: #{head_forward.1} parent=5 // pred_check_branch
        %133 = sbr.rel (%p131) target = $region24
      $region23: #{head_forward.1} parent=5 // pred_region
        // Predicated region
        $region25: #{head_forward.1} parent=23 // pred_check
          %p134 = pneg %p35
        $region26: #{head_forward.1} parent=23 // pred_check_branch
          %136 = sbr.rel (%p134) target = $region28
        $region27: #{head_forward.1} parent=23 // pred_region
          %s137 = sand.u32 %s25, 1
          %s138 = scalar_lea.sflag [#allocation3], %s137
          %s139 = sand.u32 %s25, 1
          %s140 = smul.addr %s139, 384
          %s141 = scalar_lea.vmem [#allocation2], %s140
          %s142 = smul.u32 2, %s15
          %144 = vsyncadd %s138, 0
          %s145 = smul.addr %s142, 24
          %s146 = smul.addr %s145, 8
          %s147 = scalar_lea.hbm %s0, %s146
          %s148 = sshll.u32 %s147, 4
          %s149 = int_to_ptr.hbm [resolvable:$true] %s148
          %s150 = sshll.u32 %s141, 4
          %s151 = int_to_ptr.vmem [resolvable:$true] %s150
          %156 = dma.hbm_to_vmem [thread:$0]  %s149, 6144, %s151, %s138, 384, 384, 24
        $region28: #{head_forward.1} parent=23 // pred_fallthru
          _
      $region24: #{head_forward.1} parent=5 // pred_fallthru
        _
      %p157 = scmp.le.s32.totalorder 1, %s15
      %p158 = scmp.lt.s32.totalorder %s15, 3
      %p159 = pnand %p157, %p158
      %p160 = pneg %p159
      // Predicated region
      $region29: #{head_forward.1} parent=5 // pred_check
        _
      $region30: #{head_forward.1} parent=5 // pred_check_branch
        %162 = sbr.rel (%p159) target = $region32
      $region31: #{head_forward.1} parent=5 // pred_region
        %s163 = ssub.s32 %s15, 1
        %s164 = sand.u32 %s28, 1
        %s165 = scalar_lea.sflag [#allocation3], %s164
        %s166 = sand.u32 %s28, 1
        %s167 = smul.addr %s166, 384
        %s168 = scalar_lea.vmem [#allocation2], %s167
        // Predicated region
        $region33: #{head_forward.1} parent=31 // pred_check
          %p169 = pneg %p41
        $region34: #{head_forward.1} parent=31 // pred_check_branch
          %171 = sbr.rel (%p169) target = $region36
        $region35: #{head_forward.1} parent=31 // pred_region
          %173 = dma.done %s165, 6144
        $region36: #{head_forward.1} parent=31 // pred_fallthru
          _
        %s174 = sand.u32 %s28, 1
        %s175 = scalar_lea.sflag [#allocation3], %s174
        %s176 = sand.u32 %s28, 1
        %s177 = smul.addr %s176, 384
        %s178 = scalar_lea.vmem [#allocation2], %s177
        %p179 = pneg %p41
        %p180 = pneg %p38
        %p181 = pneg %p62
        %p182 = pneg %p59
        %p183 = pneg %p83
        %p184 = pneg %p80
        %p185 = pneg %p109
        %p186 = pneg %p106
        %s187 = sand.u32 %s96, 1
        %s188 = scalar_lea.sflag [#allocation4], %s187
        %s189 = sand.u32 %s96, 1
        %s190 = smul.addr %s189, 128
        %s191 = scalar_lea.vmem [#allocation5], %s190
        %s192 = smul.u32 2, %s20
        %s193 = smul.u32 2, %s20
        %v195 = vld [vmem:[%s168] sm:$0xff]
        %v196 = vld [vmem:[%s168 + $0x8] sm:$0xff]
        %v197 = vld [vmem:[%s168 + $0x10] sm:$0xff]
        %v198 = vld [vmem:[%s168 + $0x18] sm:$0xff]
        %v199 = vld [vmem:[%s168 + $0x20] sm:$0xff]
        %v200 = vld [vmem:[%s168 + $0x28] sm:$0xff]
        %v201 = vld [vmem:[%s168 + $0x30] sm:$0xff]
        %v202 = vld [vmem:[%s168 + $0x38] sm:$0xff]
        %v203 = vld [vmem:[%s168 + $0x40] sm:$0xff]
        %v204 = vld [vmem:[%s168 + $0x48] sm:$0xff]
        %v205 = vld [vmem:[%s168 + $0x50] sm:$0xff]
        %v206 = vld [vmem:[%s168 + $0x58] sm:$0xff]
        %v207 = vld [vmem:[%s168 + $0x60] sm:$0xff]
        %v208 = vld [vmem:[%s168 + $0x68] sm:$0xff]
        %v209 = vld [vmem:[%s168 + $0x70] sm:$0xff]
        %v210 = vld [vmem:[%s168 + $0x78] sm:$0xff]
        %v211 = vld [vmem:[%s168 + $0x80] sm:$0xff]
        %v212 = vld [vmem:[%s168 + $0x88] sm:$0xff]
        %v213 = vld [vmem:[%s168 + $0x90] sm:$0xff]
        %v214 = vld [vmem:[%s168 + $0x98] sm:$0xff]
        %v215 = vld [vmem:[%s168 + $0xa0] sm:$0xff]
        %v216 = vld [vmem:[%s168 + $0xa8] sm:$0xff]
        %v217 = vld [vmem:[%s168 + $0xb0] sm:$0xff]
        %v218 = vld [vmem:[%s168 + $0xb8] sm:$0xff]
        %v219 = vld [vmem:[%s168 + $0xc0] sm:$0xff]
        %v220 = vld [vmem:[%s168 + $0xc8] sm:$0xff]
        %v221 = vld [vmem:[%s168 + $0xd0] sm:$0xff]
        %v222 = vld [vmem:[%s168 + $0xd8] sm:$0xff]
        %v223 = vld [vmem:[%s168 + $0xe0] sm:$0xff]
        %v224 = vld [vmem:[%s168 + $0xe8] sm:$0xff]
        %v225 = vld [vmem:[%s168 + $0xf0] sm:$0xff]
        %v226 = vld [vmem:[%s168 + $0xf8] sm:$0xff]
        %v227 = vld [vmem:[%s168 + $0x100] sm:$0xff]
        %v228 = vld [vmem:[%s168 + $0x108] sm:$0xff]
        %v229 = vld [vmem:[%s168 + $0x110] sm:$0xff]
        %v230 = vld [vmem:[%s168 + $0x118] sm:$0xff]
        %v231 = vld [vmem:[%s168 + $0x120] sm:$0xff]
        %v232 = vld [vmem:[%s168 + $0x128] sm:$0xff]
        %v233 = vld [vmem:[%s168 + $0x130] sm:$0xff]
        %v234 = vld [vmem:[%s168 + $0x138] sm:$0xff]
        %v235 = vld [vmem:[%s168 + $0x140] sm:$0xff]
        %v236 = vld [vmem:[%s168 + $0x148] sm:$0xff]
        %v237 = vld [vmem:[%s168 + $0x150] sm:$0xff]
        %v238 = vld [vmem:[%s168 + $0x158] sm:$0xff]
        %v239 = vld [vmem:[%s168 + $0x160] sm:$0xff]
        %v240 = vld [vmem:[%s168 + $0x168] sm:$0xff]
        %v241 = vld [vmem:[%s168 + $0x170] sm:$0xff]
        %v242 = vld [vmem:[%s168 + $0x178] sm:$0xff]
        %v243 = vpack.c.bf16 %v198, %v195
        %v244 = vpack.c.bf16 %v199, %v196
        %v245 = vpack.c.bf16 %v200, %v197
        %v246 = vpack.c.bf16 %v204, %v201
        %v247 = vpack.c.bf16 %v205, %v202
        %v248 = vpack.c.bf16 %v206, %v203
        %v249 = vpack.c.bf16 %v210, %v207
        %v250 = vpack.c.bf16 %v211, %v208
        %v251 = vpack.c.bf16 %v212, %v209
        %v252 = vpack.c.bf16 %v216, %v213
        %v253 = vpack.c.bf16 %v217, %v214
        %v254 = vpack.c.bf16 %v218, %v215
        %v255 = vpack.c.bf16 %v222, %v219
        %v256 = vpack.c.bf16 %v223, %v220
        %v257 = vpack.c.bf16 %v224, %v221
        %v258 = vpack.c.bf16 %v228, %v225
        %v259 = vpack.c.bf16 %v229, %v226
        %v260 = vpack.c.bf16 %v230, %v227
        %v261 = vpack.c.bf16 %v234, %v231
        %v262 = vpack.c.bf16 %v235, %v232
        %v263 = vpack.c.bf16 %v236, %v233
        %v264 = vpack.c.bf16 %v240, %v237
        %v265 = vpack.c.bf16 %v241, %v238
        %v266 = vpack.c.bf16 %v242, %v239
        %v267 = vld [vmem:[%s1] sm:$0xff]
        %v268 = vld [vmem:[%s1 + $0x8] sm:$0xff]
        %v269 = vld [vmem:[%s1 + $0x10] sm:$0xff]
        %v270 = vld [vmem:[%s1 + $0x18] sm:$0xff]
        %v271 = vld [vmem:[%s1 + $0x20] sm:$0xff]
        %v272 = vld [vmem:[%s1 + $0x28] sm:$0xff]
        %v273 = vld [vmem:[%s1 + $0x30] sm:$0xff]
        %v274 = vld [vmem:[%s1 + $0x38] sm:$0xff]
        %v275 = vld [vmem:[%s1 + $0x40] sm:$0xff]
        %v276 = vld [vmem:[%s1 + $0x48] sm:$0xff]
        %v277 = vld [vmem:[%s1 + $0x50] sm:$0xff]
        %v278 = vld [vmem:[%s1 + $0x58] sm:$0xff]
        %v279 = vld [vmem:[%s1 + $0x60] sm:$0xff]
        %v280 = vld [vmem:[%s1 + $0x68] sm:$0xff]
        %v281 = vld [vmem:[%s1 + $0x70] sm:$0xff]
        %v282 = vld [vmem:[%s1 + $0x78] sm:$0xff]
        %v283 = vld [vmem:[%s1 + $0x80] sm:$0xff]
        %v284 = vld [vmem:[%s1 + $0x88] sm:$0xff]
        %v285 = vld [vmem:[%s1 + $0x90] sm:$0xff]
        %v286 = vld [vmem:[%s1 + $0x98] sm:$0xff]
        %v287 = vld [vmem:[%s1 + $0xa0] sm:$0xff]
        %v288 = vld [vmem:[%s1 + $0xa8] sm:$0xff]
        %v289 = vld [vmem:[%s1 + $0xb0] sm:$0xff]
        %v290 = vld [vmem:[%s1 + $0xb8] sm:$0xff]
        %v291 = vld [vmem:[%s1 + $0xc0] sm:$0xff]
        %v292 = vld [vmem:[%s1 + $0xc8] sm:$0xff]
        %v293 = vld [vmem:[%s1 + $0xd0] sm:$0xff]
        %v294 = vld [vmem:[%s1 + $0xd8] sm:$0xff]
        %v295 = vld [vmem:[%s1 + $0xe0] sm:$0xff]
        %v296 = vld [vmem:[%s1 + $0xe8] sm:$0xff]
        %v297 = vld [vmem:[%s1 + $0xf0] sm:$0xff]
        %v298 = vld [vmem:[%s1 + $0xf8] sm:$0xff]
        %v299 = vld [vmem:[%s1 + $0x100] sm:$0xff]
        %v300 = vld [vmem:[%s1 + $0x108] sm:$0xff]
        %v301 = vld [vmem:[%s1 + $0x110] sm:$0xff]
        %v302 = vld [vmem:[%s1 + $0x118] sm:$0xff]
        %v303 = vld [vmem:[%s1 + $0x120] sm:$0xff]
        %v304 = vld [vmem:[%s1 + $0x128] sm:$0xff]
        %v305 = vld [vmem:[%s1 + $0x130] sm:$0xff]
        %v306 = vld [vmem:[%s1 + $0x138] sm:$0xff]
        %v307 = vld [vmem:[%s1 + $0x140] sm:$0xff]
        %v308 = vld [vmem:[%s1 + $0x148] sm:$0xff]
        %v309 = vld [vmem:[%s1 + $0x150] sm:$0xff]
        %v310 = vld [vmem:[%s1 + $0x158] sm:$0xff]
        %v311 = vld [vmem:[%s1 + $0x160] sm:$0xff]
        %v312 = vld [vmem:[%s1 + $0x168] sm:$0xff]
        %v313 = vld [vmem:[%s1 + $0x170] sm:$0xff]
        %v314 = vld [vmem:[%s1 + $0x178] sm:$0xff]
        %v363 = vunpack.c.l.b16 %v267
        %v364 = vunpack.c.h.b16 %v267
        %v365 = vunpack.c.l.b16 %v268
        %v366 = vunpack.c.h.b16 %v268
        %v367 = vunpack.c.l.b16 %v269
        %v368 = vunpack.c.h.b16 %v269
        %v369 = vunpack.c.l.b16 %v270
        %v370 = vunpack.c.h.b16 %v270
        %v371 = vunpack.c.l.b16 %v271
        %v372 = vunpack.c.h.b16 %v271
        %v373 = vunpack.c.l.b16 %v272
        %v374 = vunpack.c.h.b16 %v272
        %v375 = vunpack.c.l.b16 %v273
        %v376 = vunpack.c.h.b16 %v273
        %v377 = vunpack.c.l.b16 %v274
        %v378 = vunpack.c.h.b16 %v274
        %v379 = vunpack.c.l.b16 %v275
        %v380 = vunpack.c.h.b16 %v275
        %v381 = vunpack.c.l.b16 %v276
        %v382 = vunpack.c.h.b16 %v276
        %v383 = vunpack.c.l.b16 %v277
        %v384 = vunpack.c.h.b16 %v277
        %v385 = vunpack.c.l.b16 %v278
        %v386 = vunpack.c.h.b16 %v278
        %v387 = vunpack.c.l.b16 %v279
        %v388 = vunpack.c.h.b16 %v279
        %v389 = vunpack.c.l.b16 %v280
        %v390 = vunpack.c.h.b16 %v280
        %v391 = vunpack.c.l.b16 %v281
        %v392 = vunpack.c.h.b16 %v281
        %v393 = vunpack.c.l.b16 %v282
        %v394 = vunpack.c.h.b16 %v282
        %v395 = vunpack.c.l.b16 %v283
        %v396 = vunpack.c.h.b16 %v283
        %v397 = vunpack.c.l.b16 %v284
        %v398 = vunpack.c.h.b16 %v284
        %v399 = vunpack.c.l.b16 %v285
        %v400 = vunpack.c.h.b16 %v285
        %v401 = vunpack.c.l.b16 %v286
        %v402 = vunpack.c.h.b16 %v286
        %v403 = vunpack.c.l.b16 %v287
        %v404 = vunpack.c.h.b16 %v287
        %v405 = vunpack.c.l.b16 %v288
        %v406 = vunpack.c.h.b16 %v288
        %v407 = vunpack.c.l.b16 %v289
        %v408 = vunpack.c.h.b16 %v289
        %v409 = vunpack.c.l.b16 %v290
        %v410 = vunpack.c.h.b16 %v290
        %v411 = vunpack.c.l.b16 %v291
        %v412 = vunpack.c.h.b16 %v291
        %v413 = vunpack.c.l.b16 %v292
        %v414 = vunpack.c.h.b16 %v292
        %v415 = vunpack.c.l.b16 %v293
        %v416 = vunpack.c.h.b16 %v293
        %v417 = vunpack.c.l.b16 %v294
        %v418 = vunpack.c.h.b16 %v294
        %v419 = vunpack.c.l.b16 %v295
        %v420 = vunpack.c.h.b16 %v295
        %v421 = vunpack.c.l.b16 %v296
        %v422 = vunpack.c.h.b16 %v296
        %v423 = vunpack.c.l.b16 %v297
        %v424 = vunpack.c.h.b16 %v297
        %v425 = vunpack.c.l.b16 %v298
        %v426 = vunpack.c.h.b16 %v298
        %v427 = vunpack.c.l.b16 %v299
        %v428 = vunpack.c.h.b16 %v299
        %v429 = vunpack.c.l.b16 %v300
        %v430 = vunpack.c.h.b16 %v300
        %v431 = vunpack.c.l.b16 %v301
        %v432 = vunpack.c.h.b16 %v301
        %v433 = vunpack.c.l.b16 %v302
        %v434 = vunpack.c.h.b16 %v302
        %v435 = vunpack.c.l.b16 %v303
        %v436 = vunpack.c.h.b16 %v303
        %v437 = vunpack.c.l.b16 %v304
        %v438 = vunpack.c.h.b16 %v304
        %v439 = vunpack.c.l.b16 %v305
        %v440 = vunpack.c.h.b16 %v305
        %v441 = vunpack.c.l.b16 %v306
        %v442 = vunpack.c.h.b16 %v306
        %v443 = vunpack.c.l.b16 %v307
        %v444 = vunpack.c.h.b16 %v307
        %v445 = vunpack.c.l.b16 %v308
        %v446 = vunpack.c.h.b16 %v308
        %v447 = vunpack.c.l.b16 %v309
        %v448 = vunpack.c.h.b16 %v309
        %v449 = vunpack.c.l.b16 %v310
        %v450 = vunpack.c.h.b16 %v310
        %v451 = vunpack.c.l.b16 %v311
        %v452 = vunpack.c.h.b16 %v311
        %v453 = vunpack.c.l.b16 %v312
        %v454 = vunpack.c.h.b16 %v312
        %v455 = vunpack.c.l.b16 %v313
        %v456 = vunpack.c.h.b16 %v313
        %v457 = vunpack.c.l.b16 %v314
        %v458 = vunpack.c.h.b16 %v314
        %v459 = vpack.c.b16 %v365, %v363
        %v460 = vpack.c.b16 %v366, %v364
        %v461 = vpack.c.b16 %v369, %v367
        %v462 = vpack.c.b16 %v370, %v368
        %v463 = vpack.c.b16 %v373, %v371
        %v464 = vpack.c.b16 %v374, %v372
        %v465 = vpack.c.b16 %v377, %v375
        %v466 = vpack.c.b16 %v378, %v376
        %v467 = vpack.c.b16 %v381, %v379
        %v468 = vpack.c.b16 %v382, %v380
        %v469 = vpack.c.b16 %v385, %v383
        %v470 = vpack.c.b16 %v386, %v384
        %v471 = vpack.c.b16 %v389, %v387
        %v472 = vpack.c.b16 %v390, %v388
        %v473 = vpack.c.b16 %v393, %v391
        %v474 = vpack.c.b16 %v394, %v392
        %v475 = vpack.c.b16 %v397, %v395
        %v476 = vpack.c.b16 %v398, %v396
        %v477 = vpack.c.b16 %v401, %v399
        %v478 = vpack.c.b16 %v402, %v400
        %v479 = vpack.c.b16 %v405, %v403
        %v480 = vpack.c.b16 %v406, %v404
        %v481 = vpack.c.b16 %v409, %v407
        %v482 = vpack.c.b16 %v410, %v408
        %v483 = vpack.c.b16 %v413, %v411
        %v484 = vpack.c.b16 %v414, %v412
        %v485 = vpack.c.b16 %v417, %v415
        %v486 = vpack.c.b16 %v418, %v416
        %v487 = vpack.c.b16 %v421, %v419
        %v488 = vpack.c.b16 %v422, %v420
        %v489 = vpack.c.b16 %v425, %v423
        %v490 = vpack.c.b16 %v426, %v424
        %v491 = vpack.c.b16 %v429, %v427
        %v492 = vpack.c.b16 %v430, %v428
        %v493 = vpack.c.b16 %v433, %v431
        %v494 = vpack.c.b16 %v434, %v432
        %v495 = vpack.c.b16 %v437, %v435
        %v496 = vpack.c.b16 %v438, %v436
        %v497 = vpack.c.b16 %v441, %v439
        %v498 = vpack.c.b16 %v442, %v440
        %v499 = vpack.c.b16 %v445, %v443
        %v500 = vpack.c.b16 %v446, %v444
        %v501 = vpack.c.b16 %v449, %v447
        %v502 = vpack.c.b16 %v450, %v448
        %v503 = vpack.c.b16 %v453, %v451
        %v504 = vpack.c.b16 %v454, %v452
        %v505 = vpack.c.b16 %v457, %v455
        %v506 = vpack.c.b16 %v458, %v456
        %555 = vmatpush.bf16.msra.mxu0 %v473
        %556 = vmatpush.bf16.msra.mxu0 %v471
        %557 = vmatpush.bf16.msra.mxu0 %v469
        %558 = vmatpush.bf16.msra.mxu0 %v467
        %559 = vmatpush.bf16.msra.mxu0 %v465
        %560 = vmatpush.bf16.msra.mxu0 %v463
        %561 = vmatpush.bf16.msra.mxu0 %v461
        %562 = vmatpush.bf16.msra.mxu0 %v459
        %563 = vmatmul.bf16.gmra.mxu0 %v243
        %v564 = vpop.f32.mrf.mxu0
        %v565 = vadd.f32 0.0, %v564
        %v566 = vpop.f32.mrf.mxu0
        %v567 = vadd.f32 0.0, %v566
        %568 = vmatmul.bf16.gmra.mxu0 %v246
        %v569 = vpop.f32.mrf.mxu0
        %v570 = vadd.f32 0.0, %v569
        %v571 = vpop.f32.mrf.mxu0
        %v572 = vadd.f32 0.0, %v571
        %573 = vmatmul.bf16.gmra.mxu0 %v249
        %v574 = vpop.f32.mrf.mxu0
        %v575 = vadd.f32 0.0, %v574
        %v576 = vpop.f32.mrf.mxu0
        %v577 = vadd.f32 0.0, %v576
        %578 = vmatmul.bf16.gmra.mxu0 %v252
        %v579 = vpop.f32.mrf.mxu0
        %v580 = vadd.f32 0.0, %v579
        %v581 = vpop.f32.mrf.mxu0
        %v582 = vadd.f32 0.0, %v581
        %583 = vmatmul.bf16.gmra.mxu0 %v255
        %v584 = vpop.f32.mrf.mxu0
        %v585 = vadd.f32 0.0, %v584
        %v586 = vpop.f32.mrf.mxu0
        %v587 = vadd.f32 0.0, %v586
        %588 = vmatmul.bf16.gmra.mxu0 %v258
        %v589 = vpop.f32.mrf.mxu0
        %v590 = vadd.f32 0.0, %v589
        %v591 = vpop.f32.mrf.mxu0
        %v592 = vadd.f32 0.0, %v591
        %593 = vmatmul.bf16.gmra.mxu0 %v261
        %v594 = vpop.f32.mrf.mxu0
        %v595 = vadd.f32 0.0, %v594
        %v596 = vpop.f32.mrf.mxu0
        %v597 = vadd.f32 0.0, %v596
        %598 = vmatmul.bf16.gmra.mxu0 %v264
        %v599 = vpop.f32.mrf.mxu0
        %v600 = vadd.f32 0.0, %v599
        %v601 = vpop.f32.mrf.mxu0
        %v602 = vadd.f32 0.0, %v601
        %603 = vdwg.mxu0
        %604 = vmatpush.bf16.msra.mxu0 %v489
        %605 = vmatpush.bf16.msra.mxu0 %v487
        %606 = vmatpush.bf16.msra.mxu0 %v485
        %607 = vmatpush.bf16.msra.mxu0 %v483
        %608 = vmatpush.bf16.msra.mxu0 %v481
        %609 = vmatpush.bf16.msra.mxu0 %v479
        %610 = vmatpush.bf16.msra.mxu0 %v477
        %611 = vmatpush.bf16.msra.mxu0 %v475
        %612 = vmatmul.bf16.gmra.mxu0 %v244
        %v613 = vpop.f32.mrf.mxu0
        %v614 = vadd.f32 %v565, %v613
        %v615 = vpop.f32.mrf.mxu0
        %v616 = vadd.f32 %v567, %v615
        %617 = vmatmul.bf16.gmra.mxu0 %v247
        %v618 = vpop.f32.mrf.mxu0
        %v619 = vadd.f32 %v570, %v618
        %v620 = vpop.f32.mrf.mxu0
        %v621 = vadd.f32 %v572, %v620
        %622 = vmatmul.bf16.gmra.mxu0 %v250
        %v623 = vpop.f32.mrf.mxu0
        %v624 = vadd.f32 %v575, %v623
        %v625 = vpop.f32.mrf.mxu0
        %v626 = vadd.f32 %v577, %v625
        %627 = vmatmul.bf16.gmra.mxu0 %v253
        %v628 = vpop.f32.mrf.mxu0
        %v629 = vadd.f32 %v580, %v628
        %v630 = vpop.f32.mrf.mxu0
        %v631 = vadd.f32 %v582, %v630
        %632 = vmatmul.bf16.gmra.mxu0 %v256
        %v633 = vpop.f32.mrf.mxu0
        %v634 = vadd.f32 %v585, %v633
        %v635 = vpop.f32.mrf.mxu0
        %v636 = vadd.f32 %v587, %v635
        %637 = vmatmul.bf16.gmra.mxu0 %v259
        %v638 = vpop.f32.mrf.mxu0
        %v639 = vadd.f32 %v590, %v638
        %v640 = vpop.f32.mrf.mxu0
        %v641 = vadd.f32 %v592, %v640
        %642 = vmatmul.bf16.gmra.mxu0 %v262
        %v643 = vpop.f32.mrf.mxu0
        %v644 = vadd.f32 %v595, %v643
        %v645 = vpop.f32.mrf.mxu0
        %v646 = vadd.f32 %v597, %v645
        %647 = vmatmul.bf16.gmra.mxu0 %v265
        %v648 = vpop.f32.mrf.mxu0
        %v649 = vadd.f32 %v600, %v648
        %v650 = vpop.f32.mrf.mxu0
        %v651 = vadd.f32 %v602, %v650
        %652 = vdwg.mxu0
        %653 = vmatpush.bf16.msra.mxu0 %v505
        %654 = vmatpush.bf16.msra.mxu0 %v503
        %655 = vmatpush.bf16.msra.mxu0 %v501
        %656 = vmatpush.bf16.msra.mxu0 %v499
        %657 = vmatpush.bf16.msra.mxu0 %v497
        %658 = vmatpush.bf16.msra.mxu0 %v495
        %659 = vmatpush.bf16.msra.mxu0 %v493
        %660 = vmatpush.bf16.msra.mxu0 %v491
        %661 = vmatmul.bf16.gmra.mxu0 %v245
        %v662 = vpop.f32.mrf.mxu0
        %v663 = vadd.f32 %v614, %v662
        %v664 = vpop.f32.mrf.mxu0
        %v665 = vadd.f32 %v616, %v664
        %666 = vmatmul.bf16.gmra.mxu0 %v248
        %v667 = vpop.f32.mrf.mxu0
        %v668 = vadd.f32 %v619, %v667
        %v669 = vpop.f32.mrf.mxu0
        %v670 = vadd.f32 %v621, %v669
        %671 = vmatmul.bf16.gmra.mxu0 %v251
        %v672 = vpop.f32.mrf.mxu0
        %v673 = vadd.f32 %v624, %v672
        %v674 = vpop.f32.mrf.mxu0
        %v675 = vadd.f32 %v626, %v674
        %676 = vmatmul.bf16.gmra.mxu0 %v254
        %v677 = vpop.f32.mrf.mxu0
        %v678 = vadd.f32 %v629, %v677
        %v679 = vpop.f32.mrf.mxu0
        %v680 = vadd.f32 %v631, %v679
        %681 = vmatmul.bf16.gmra.mxu0 %v257
        %v682 = vpop.f32.mrf.mxu0
        %v683 = vadd.f32 %v634, %v682
        %v684 = vpop.f32.mrf.mxu0
        %v685 = vadd.f32 %v636, %v684
        %686 = vmatmul.bf16.gmra.mxu0 %v260
        %v687 = vpop.f32.mrf.mxu0
        %v688 = vadd.f32 %v639, %v687
        %v689 = vpop.f32.mrf.mxu0
        %v690 = vadd.f32 %v641, %v689
        %691 = vmatmul.bf16.gmra.mxu0 %v263
        %v692 = vpop.f32.mrf.mxu0
        %v693 = vadd.f32 %v644, %v692
        %v694 = vpop.f32.mrf.mxu0
        %v695 = vadd.f32 %v646, %v694
        %696 = vmatmul.bf16.gmra.mxu0 %v266
        %v697 = vpop.f32.mrf.mxu0
        %v698 = vadd.f32 %v649, %v697
        %v699 = vpop.f32.mrf.mxu0
        %v700 = vadd.f32 %v651, %v699
        %701 = vdwg.mxu0
        %702 = vmatpush.bf16.msra.mxu0 %v474
        %703 = vmatpush.bf16.msra.mxu0 %v472
        %704 = vmatpush.bf16.msra.mxu0 %v470
        %705 = vmatpush.bf16.msra.mxu0 %v468
        %706 = vmatpush.bf16.msra.mxu0 %v466
        %707 = vmatpush.bf16.msra.mxu0 %v464
        %708 = vmatpush.bf16.msra.mxu0 %v462
        %709 = vmatpush.bf16.msra.mxu0 %v460
        %710 = vmatmul.bf16.gmra.mxu0 %v243
        %v711 = vpop.f32.mrf.mxu0
        %v712 = vadd.f32 0.0, %v711
        %v713 = vpop.f32.mrf.mxu0
        %v714 = vadd.f32 0.0, %v713
        %715 = vmatmul.bf16.gmra.mxu0 %v246
        %v716 = vpop.f32.mrf.mxu0
        %v717 = vadd.f32 0.0, %v716
        %v718 = vpop.f32.mrf.mxu0
        %v719 = vadd.f32 0.0, %v718
        %720 = vmatmul.bf16.gmra.mxu0 %v249
        %v721 = vpop.f32.mrf.mxu0
        %v722 = vadd.f32 0.0, %v721
        %v723 = vpop.f32.mrf.mxu0
        %v724 = vadd.f32 0.0, %v723
        %725 = vmatmul.bf16.gmra.mxu0 %v252
        %v726 = vpop.f32.mrf.mxu0
        %v727 = vadd.f32 0.0, %v726
        %v728 = vpop.f32.mrf.mxu0
        %v729 = vadd.f32 0.0, %v728
        %730 = vmatmul.bf16.gmra.mxu0 %v255
        %v731 = vpop.f32.mrf.mxu0
        %v732 = vadd.f32 0.0, %v731
        %v733 = vpop.f32.mrf.mxu0
        %v734 = vadd.f32 0.0, %v733
        %735 = vmatmul.bf16.gmra.mxu0 %v258
        %v736 = vpop.f32.mrf.mxu0
        %v737 = vadd.f32 0.0, %v736
        %v738 = vpop.f32.mrf.mxu0
        %v739 = vadd.f32 0.0, %v738
        %740 = vmatmul.bf16.gmra.mxu0 %v261
        %v741 = vpop.f32.mrf.mxu0
        %v742 = vadd.f32 0.0, %v741
        %v743 = vpop.f32.mrf.mxu0
        %v744 = vadd.f32 0.0, %v743
        %745 = vmatmul.bf16.gmra.mxu0 %v264
        %v746 = vpop.f32.mrf.mxu0
        %v747 = vadd.f32 0.0, %v746
        %v748 = vpop.f32.mrf.mxu0
        %v749 = vadd.f32 0.0, %v748
        %750 = vdwg.mxu0
        %751 = vmatpush.bf16.msra.mxu0 %v490
        %752 = vmatpush.bf16.msra.mxu0 %v488
        %753 = vmatpush.bf16.msra.mxu0 %v486
        %754 = vmatpush.bf16.msra.mxu0 %v484
        %755 = vmatpush.bf16.msra.mxu0 %v482
        %756 = vmatpush.bf16.msra.mxu0 %v480
        %757 = vmatpush.bf16.msra.mxu0 %v478
        %758 = vmatpush.bf16.msra.mxu0 %v476
        %759 = vmatmul.bf16.gmra.mxu0 %v244
        %v760 = vpop.f32.mrf.mxu0
        %v761 = vadd.f32 %v712, %v760
        %v762 = vpop.f32.mrf.mxu0
        %v763 = vadd.f32 %v714, %v762
        %764 = vmatmul.bf16.gmra.mxu0 %v247
        %v765 = vpop.f32.mrf.mxu0
        %v766 = vadd.f32 %v717, %v765
        %v767 = vpop.f32.mrf.mxu0
        %v768 = vadd.f32 %v719, %v767
        %769 = vmatmul.bf16.gmra.mxu0 %v250
        %v770 = vpop.f32.mrf.mxu0
        %v771 = vadd.f32 %v722, %v770
        %v772 = vpop.f32.mrf.mxu0
        %v773 = vadd.f32 %v724, %v772
        %774 = vmatmul.bf16.gmra.mxu0 %v253
        %v775 = vpop.f32.mrf.mxu0
        %v776 = vadd.f32 %v727, %v775
        %v777 = vpop.f32.mrf.mxu0
        %v778 = vadd.f32 %v729, %v777
        %779 = vmatmul.bf16.gmra.mxu0 %v256
        %v780 = vpop.f32.mrf.mxu0
        %v781 = vadd.f32 %v732, %v780
        %v782 = vpop.f32.mrf.mxu0
        %v783 = vadd.f32 %v734, %v782
        %784 = vmatmul.bf16.gmra.mxu0 %v259
        %v785 = vpop.f32.mrf.mxu0
        %v786 = vadd.f32 %v737, %v785
        %v787 = vpop.f32.mrf.mxu0
        %v788 = vadd.f32 %v739, %v787
        %789 = vmatmul.bf16.gmra.mxu0 %v262
        %v790 = vpop.f32.mrf.mxu0
        %v791 = vadd.f32 %v742, %v790
        %v792 = vpop.f32.mrf.mxu0
        %v793 = vadd.f32 %v744, %v792
        %794 = vmatmul.bf16.gmra.mxu0 %v265
        %v795 = vpop.f32.mrf.mxu0
        %v796 = vadd.f32 %v747, %v795
        %v797 = vpop.f32.mrf.mxu0
        %v798 = vadd.f32 %v749, %v797
        %799 = vdwg.mxu0
        %800 = vmatpush.bf16.msra.mxu0 %v506
        %801 = vmatpush.bf16.msra.mxu0 %v504
        %802 = vmatpush.bf16.msra.mxu0 %v502
        %803 = vmatpush.bf16.msra.mxu0 %v500
        %804 = vmatpush.bf16.msra.mxu0 %v498
        %805 = vmatpush.bf16.msra.mxu0 %v496
        %806 = vmatpush.bf16.msra.mxu0 %v494
        %807 = vmatpush.bf16.msra.mxu0 %v492
        %808 = vmatmul.bf16.gmra.mxu0 %v245
        %v809 = vpop.f32.mrf.mxu0
        %v810 = vadd.f32 %v761, %v809
        %v811 = vpop.f32.mrf.mxu0
        %v812 = vadd.f32 %v763, %v811
        %813 = vmatmul.bf16.gmra.mxu0 %v248
        %v814 = vpop.f32.mrf.mxu0
        %v815 = vadd.f32 %v766, %v814
        %v816 = vpop.f32.mrf.mxu0
        %v817 = vadd.f32 %v768, %v816
        %818 = vmatmul.bf16.gmra.mxu0 %v251
        %v819 = vpop.f32.mrf.mxu0
        %v820 = vadd.f32 %v771, %v819
        %v821 = vpop.f32.mrf.mxu0
        %v822 = vadd.f32 %v773, %v821
        %823 = vmatmul.bf16.gmra.mxu0 %v254
        %v824 = vpop.f32.mrf.mxu0
        %v825 = vadd.f32 %v776, %v824
        %v826 = vpop.f32.mrf.mxu0
        %v827 = vadd.f32 %v778, %v826
        %828 = vmatmul.bf16.gmra.mxu0 %v257
        %v829 = vpop.f32.mrf.mxu0
        %v830 = vadd.f32 %v781, %v829
        %v831 = vpop.f32.mrf.mxu0
        %v832 = vadd.f32 %v783, %v831
        %833 = vmatmul.bf16.gmra.mxu0 %v260
        %v834 = vpop.f32.mrf.mxu0
        %v835 = vadd.f32 %v786, %v834
        %v836 = vpop.f32.mrf.mxu0
        %v837 = vadd.f32 %v788, %v836
        %838 = vmatmul.bf16.gmra.mxu0 %v263
        %v839 = vpop.f32.mrf.mxu0
        %v840 = vadd.f32 %v791, %v839
        %v841 = vpop.f32.mrf.mxu0
        %v842 = vadd.f32 %v793, %v841
        %843 = vmatmul.bf16.gmra.mxu0 %v266
        %v844 = vpop.f32.mrf.mxu0
        %v845 = vadd.f32 %v796, %v844
        %v846 = vpop.f32.mrf.mxu0
        %v847 = vadd.f32 %v798, %v846
        %848 = vdwg.mxu0
        %v849 = vpack.c.bf16 %v663, %v663
        %v850 = vpack.c.bf16 %v665, %v665
        %v851 = vpack.c.bf16 %v668, %v668
        %v852 = vpack.c.bf16 %v670, %v670
        %v853 = vpack.c.bf16 %v673, %v673
        %v854 = vpack.c.bf16 %v675, %v675
        %v855 = vpack.c.bf16 %v678, %v678
        %v856 = vpack.c.bf16 %v680, %v680
        %v857 = vpack.c.bf16 %v683, %v683
        %v858 = vpack.c.bf16 %v685, %v685
        %v859 = vpack.c.bf16 %v688, %v688
        %v860 = vpack.c.bf16 %v690, %v690
        %v861 = vpack.c.bf16 %v693, %v693
        %v862 = vpack.c.bf16 %v695, %v695
        %v863 = vpack.c.bf16 %v698, %v698
        %v864 = vpack.c.bf16 %v700, %v700
        %v865 = vpack.c.bf16 %v810, %v810
        %v866 = vpack.c.bf16 %v812, %v812
        %v867 = vpack.c.bf16 %v815, %v815
        %v868 = vpack.c.bf16 %v817, %v817
        %v869 = vpack.c.bf16 %v820, %v820
        %v870 = vpack.c.bf16 %v822, %v822
        %v871 = vpack.c.bf16 %v825, %v825
        %v872 = vpack.c.bf16 %v827, %v827
        %v873 = vpack.c.bf16 %v830, %v830
        %v874 = vpack.c.bf16 %v832, %v832
        %v875 = vpack.c.bf16 %v835, %v835
        %v876 = vpack.c.bf16 %v837, %v837
        %v877 = vpack.c.bf16 %v840, %v840
        %v878 = vpack.c.bf16 %v842, %v842
        %v879 = vpack.c.bf16 %v845, %v845
        %v880 = vpack.c.bf16 %v847, %v847
        %v881 = vld [vmem:[%s2] sm:$0xff]
        %v882 = vld [vmem:[%s2 + $0x8] sm:$0xff]
        %v883 = vld [vmem:[%s2 + $0x10] sm:$0xff]
        %v884 = vld [vmem:[%s2 + $0x18] sm:$0xff]
        %v885 = vld [vmem:[%s2 + $0x20] sm:$0xff]
        %v886 = vld [vmem:[%s2 + $0x28] sm:$0xff]
        %v887 = vld [vmem:[%s2 + $0x30] sm:$0xff]
        %v888 = vld [vmem:[%s2 + $0x38] sm:$0xff]
        %v897 = vunpack.c.l.b16 %v849
        %v898 = vunpack.c.l.b16 %v850
        %v899 = vunpack.c.l.b16 %v851
        %v900 = vunpack.c.l.b16 %v852
        %v901 = vunpack.c.l.b16 %v853
        %v902 = vunpack.c.l.b16 %v854
        %v903 = vunpack.c.l.b16 %v855
        %v904 = vunpack.c.l.b16 %v856
        %v905 = vpack.c.b16 %v898, %v897
        %v906 = vpack.c.b16 %v900, %v899
        %v907 = vpack.c.b16 %v902, %v901
        %v908 = vpack.c.b16 %v904, %v903
        %909 = vrot.lane.b32.xlu0 %v905, 64
        %v910 = vpop.permute.xlu0 %909
        %911 = vrot.lane.b32.xlu0 %v906, 64
        %v912 = vpop.permute.xlu0 %911
        %913 = vrot.lane.b32.xlu0 %v907, 64
        %v914 = vpop.permute.xlu0 %913
        %915 = vrot.lane.b32.xlu0 %v908, 64
        %v916 = vpop.permute.xlu0 %915
        %vm917 = vcmask 523264
        %v919 = vsel %vm917, %v905, 0
        %v922 = vsel %vm917, %v906, 0
        %v925 = vsel %vm917, %v907, 0
        %v928 = vsel %vm917, %v908, 0
        %v931 = vsel %vm917, %v910, 0
        %v934 = vsel %vm917, %v912, 0
        %v937 = vsel %vm917, %v914, 0
        %v940 = vsel %vm917, %v916, 0
        %942 = vmatpush.bf16.xpose.msra.mxu0 0
        %943 = vmatpush.bf16.xpose.msra.mxu0 0
        %944 = vmatpush.bf16.xpose.msra.mxu0 0
        %945 = vmatpush.bf16.xpose.msra.mxu0 0
        %946 = vmatpush.bf16.xpose.msra.mxu0 %v940
        %947 = vmatpush.bf16.xpose.msra.mxu0 %v937
        %948 = vmatpush.bf16.xpose.msra.mxu0 %v934
        %949 = vmatpush.bf16.xpose.msra.mxu0 %v931
        %950 = vmatmul.bf16.gmra.mxu0 %v919
        %v951 = vpop.f32.mrf.mxu0
        %v952 = vadd.f32 %v881, %v951
        %v953 = vpop.f32.mrf.mxu0
        %v954 = vadd.f32 %v882, %v953
        %955 = vmatmul.bf16.gmra.mxu0 %v922
        %v956 = vpop.f32.mrf.mxu0
        %v957 = vadd.f32 %v883, %v956
        %v958 = vpop.f32.mrf.mxu0
        %v959 = vadd.f32 %v884, %v958
        %960 = vmatmul.bf16.gmra.mxu0 %v925
        %v961 = vpop.f32.mrf.mxu0
        %v962 = vadd.f32 %v885, %v961
        %v963 = vpop.f32.mrf.mxu0
        %v964 = vadd.f32 %v886, %v963
        %965 = vmatmul.bf16.gmra.mxu0 %v928
        %v966 = vpop.f32.mrf.mxu0
        %v967 = vadd.f32 %v887, %v966
        %v968 = vpop.f32.mrf.mxu0
        %v969 = vadd.f32 %v888, %v968
        %970 = vdwg.mxu0
        %v979 = vunpack.c.l.b16 %v857
        %v980 = vunpack.c.l.b16 %v858
        %v981 = vunpack.c.l.b16 %v859
        %v982 = vunpack.c.l.b16 %v860
        %v983 = vunpack.c.l.b16 %v861
        %v984 = vunpack.c.l.b16 %v862
        %v985 = vunpack.c.l.b16 %v863
        %v986 = vunpack.c.l.b16 %v864
        %v987 = vpack.c.b16 %v980, %v979
        %v988 = vpack.c.b16 %v982, %v981
        %v989 = vpack.c.b16 %v984, %v983
        %v990 = vpack.c.b16 %v986, %v985
        %991 = vrot.lane.b32.xlu0 %v987, 64
        %v992 = vpop.permute.xlu0 %991
        %993 = vrot.lane.b32.xlu0 %v988, 64
        %v994 = vpop.permute.xlu0 %993
        %995 = vrot.lane.b32.xlu0 %v989, 64
        %v996 = vpop.permute.xlu0 %995
        %997 = vrot.lane.b32.xlu0 %v990, 64
        %v998 = vpop.permute.xlu0 %997
        %v1000 = vsel %vm917, %v987, 0
        %v1003 = vsel %vm917, %v988, 0
        %v1006 = vsel %vm917, %v989, 0
        %v1009 = vsel %vm917, %v990, 0
        %v1012 = vsel %vm917, %v992, 0
        %v1015 = vsel %vm917, %v994, 0
        %v1018 = vsel %vm917, %v996, 0
        %v1021 = vsel %vm917, %v998, 0
        %1023 = vmatpush.bf16.xpose.msra.mxu0 0
        %1024 = vmatpush.bf16.xpose.msra.mxu0 0
        %1025 = vmatpush.bf16.xpose.msra.mxu0 0
        %1026 = vmatpush.bf16.xpose.msra.mxu0 0
        %1027 = vmatpush.bf16.xpose.msra.mxu0 %v1021
        %1028 = vmatpush.bf16.xpose.msra.mxu0 %v1018
        %1029 = vmatpush.bf16.xpose.msra.mxu0 %v1015
        %1030 = vmatpush.bf16.xpose.msra.mxu0 %v1012
        %1031 = vmatmul.bf16.gmra.mxu0 %v1000
        %v1032 = vpop.f32.mrf.mxu0
        %v1033 = vadd.f32 %v881, %v1032
        %v1034 = vpop.f32.mrf.mxu0
        %v1035 = vadd.f32 %v882, %v1034
        %1036 = vmatmul.bf16.gmra.mxu0 %v1003
        %v1037 = vpop.f32.mrf.mxu0
        %v1038 = vadd.f32 %v883, %v1037
        %v1039 = vpop.f32.mrf.mxu0
        %v1040 = vadd.f32 %v884, %v1039
        %1041 = vmatmul.bf16.gmra.mxu0 %v1006
        %v1042 = vpop.f32.mrf.mxu0
        %v1043 = vadd.f32 %v885, %v1042
        %v1044 = vpop.f32.mrf.mxu0
        %v1045 = vadd.f32 %v886, %v1044
        %1046 = vmatmul.bf16.gmra.mxu0 %v1009
        %v1047 = vpop.f32.mrf.mxu0
        %v1048 = vadd.f32 %v887, %v1047
        %v1049 = vpop.f32.mrf.mxu0
        %v1050 = vadd.f32 %v888, %v1049
        %1051 = vdwg.mxu0
        %v1052 = vsel %vm917, %v952, -inf
        %1053 = vmax.xlane.f32.xlu0 %v1052
        %v1054 = vpop.xlane.xlu0 %1053
        %v1055 = vsel %vm917, %v954, -inf
        %1056 = vmax.xlane.f32.xlu0 %v1055
        %v1057 = vpop.xlane.xlu0 %1056
        %v1058 = vsel %vm917, %v957, -inf
        %1059 = vmax.xlane.f32.xlu0 %v1058
        %v1060 = vpop.xlane.xlu0 %1059
        %v1061 = vsel %vm917, %v959, -inf
        %1062 = vmax.xlane.f32.xlu0 %v1061
        %v1063 = vpop.xlane.xlu0 %1062
        %v1064 = vsel %vm917, %v962, -inf
        %1065 = vmax.xlane.f32.xlu0 %v1064
        %v1066 = vpop.xlane.xlu0 %1065
        %v1067 = vsel %vm917, %v964, -inf
        %1068 = vmax.xlane.f32.xlu0 %v1067
        %v1069 = vpop.xlane.xlu0 %1068
        %v1070 = vsel %vm917, %v967, -inf
        %1071 = vmax.xlane.f32.xlu0 %v1070
        %v1072 = vpop.xlane.xlu0 %1071
        %v1073 = vsel %vm917, %v969, -inf
        %1074 = vmax.xlane.f32.xlu0 %v1073
        %v1075 = vpop.xlane.xlu0 %1074
        %v1076 = vsel %vm917, %v1033, -inf
        %1077 = vmax.xlane.f32.xlu0 %v1076
        %v1078 = vpop.xlane.xlu0 %1077
        %v1079 = vsel %vm917, %v1035, -inf
        %1080 = vmax.xlane.f32.xlu0 %v1079
        %v1081 = vpop.xlane.xlu0 %1080
        %v1082 = vsel %vm917, %v1038, -inf
        %1083 = vmax.xlane.f32.xlu0 %v1082
        %v1084 = vpop.xlane.xlu0 %1083
        %v1085 = vsel %vm917, %v1040, -inf
        %1086 = vmax.xlane.f32.xlu0 %v1085
        %v1087 = vpop.xlane.xlu0 %1086
        %v1088 = vsel %vm917, %v1043, -inf
        %1089 = vmax.xlane.f32.xlu0 %v1088
        %v1090 = vpop.xlane.xlu0 %1089
        %v1091 = vsel %vm917, %v1045, -inf
        %1092 = vmax.xlane.f32.xlu0 %v1091
        %v1093 = vpop.xlane.xlu0 %1092
        %v1094 = vsel %vm917, %v1048, -inf
        %1095 = vmax.xlane.f32.xlu0 %v1094
        %v1096 = vpop.xlane.xlu0 %1095
        %v1097 = vsel %vm917, %v1050, -inf
        %1098 = vmax.xlane.f32.xlu0 %v1097
        %v1099 = vpop.xlane.xlu0 %1098
        %v1100 = vsub.f32 %v952, %v1054
        %v1101 = vsub.f32 %v954, %v1057
        %v1102 = vsub.f32 %v957, %v1060
        %v1103 = vsub.f32 %v959, %v1063
        %v1104 = vsub.f32 %v962, %v1066
        %v1105 = vsub.f32 %v964, %v1069
        %v1106 = vsub.f32 %v967, %v1072
        %v1107 = vsub.f32 %v969, %v1075
        %v1108 = vsub.f32 %v1033, %v1078
        %v1109 = vsub.f32 %v1035, %v1081
        %v1110 = vsub.f32 %v1038, %v1084
        %v1111 = vsub.f32 %v1040, %v1087
        %v1112 = vsub.f32 %v1043, %v1090
        %v1113 = vsub.f32 %v1045, %v1093
        %v1114 = vsub.f32 %v1048, %v1096
        %v1115 = vsub.f32 %v1050, %v1099
        %v1116 = vmul.f32 %v1100, 1.442695
        %v1117 = vpow.pop %v1116
        %v1118 = vmul.f32 %v1101, 1.442695
        %v1119 = vpow.pop %v1118
        %v1120 = vmul.f32 %v1102, 1.442695
        %v1121 = vpow.pop %v1120
        %v1122 = vmul.f32 %v1103, 1.442695
        %v1123 = vpow.pop %v1122
        %v1124 = vmul.f32 %v1104, 1.442695
        %v1125 = vpow.pop %v1124
        %v1126 = vmul.f32 %v1105, 1.442695
        %v1127 = vpow.pop %v1126
        %v1128 = vmul.f32 %v1106, 1.442695
        %v1129 = vpow.pop %v1128
        %v1130 = vmul.f32 %v1107, 1.442695
        %v1131 = vpow.pop %v1130
        %v1132 = vmul.f32 %v1108, 1.442695
        %v1133 = vpow.pop %v1132
        %v1134 = vmul.f32 %v1109, 1.442695
        %v1135 = vpow.pop %v1134
        %v1136 = vmul.f32 %v1110, 1.442695
        %v1137 = vpow.pop %v1136
        %v1138 = vmul.f32 %v1111, 1.442695
        %v1139 = vpow.pop %v1138
        %v1140 = vmul.f32 %v1112, 1.442695
        %v1141 = vpow.pop %v1140
        %v1142 = vmul.f32 %v1113, 1.442695
        %v1143 = vpow.pop %v1142
        %v1144 = vmul.f32 %v1114, 1.442695
        %v1145 = vpow.pop %v1144
        %v1146 = vmul.f32 %v1115, 1.442695
        %v1147 = vpow.pop %v1146
        %v1148 = vsel %vm917, %v1117, 0.0
        %1149 = vadd.xlane.f32.xlu0 %v1148
        %v1150 = vpop.xlane.xlu0 %1149
        %v1151 = vsel %vm917, %v1119, 0.0
        %1152 = vadd.xlane.f32.xlu0 %v1151
        %v1153 = vpop.xlane.xlu0 %1152
        %v1154 = vsel %vm917, %v1121, 0.0
        %1155 = vadd.xlane.f32.xlu0 %v1154
        %v1156 = vpop.xlane.xlu0 %1155
        %v1157 = vsel %vm917, %v1123, 0.0
        %1158 = vadd.xlane.f32.xlu0 %v1157
        %v1159 = vpop.xlane.xlu0 %1158
        %v1160 = vsel %vm917, %v1125, 0.0
        %1161 = vadd.xlane.f32.xlu0 %v1160
        %v1162 = vpop.xlane.xlu0 %1161
        %v1163 = vsel %vm917, %v1127, 0.0
        %1164 = vadd.xlane.f32.xlu0 %v1163
        %v1165 = vpop.xlane.xlu0 %1164
        %v1166 = vsel %vm917, %v1129, 0.0
        %1167 = vadd.xlane.f32.xlu0 %v1166
        %v1168 = vpop.xlane.xlu0 %1167
        %v1169 = vsel %vm917, %v1131, 0.0
        %1170 = vadd.xlane.f32.xlu0 %v1169
        %v1171 = vpop.xlane.xlu0 %1170
        %v1172 = vsel %vm917, %v1133, 0.0
        %1173 = vadd.xlane.f32.xlu0 %v1172
        %v1174 = vpop.xlane.xlu0 %1173
        %v1175 = vsel %vm917, %v1135, 0.0
        %1176 = vadd.xlane.f32.xlu0 %v1175
        %v1177 = vpop.xlane.xlu0 %1176
        %v1178 = vsel %vm917, %v1137, 0.0
        %1179 = vadd.xlane.f32.xlu0 %v1178
        %v1180 = vpop.xlane.xlu0 %1179
        %v1181 = vsel %vm917, %v1139, 0.0
        %1182 = vadd.xlane.f32.xlu0 %v1181
        %v1183 = vpop.xlane.xlu0 %1182
        %v1184 = vsel %vm917, %v1141, 0.0
        %1185 = vadd.xlane.f32.xlu0 %v1184
        %v1186 = vpop.xlane.xlu0 %1185
        %v1187 = vsel %vm917, %v1143, 0.0
        %1188 = vadd.xlane.f32.xlu0 %v1187
        %v1189 = vpop.xlane.xlu0 %1188
        %v1190 = vsel %vm917, %v1145, 0.0
        %1191 = vadd.xlane.f32.xlu0 %v1190
        %v1192 = vpop.xlane.xlu0 %1191
        %v1193 = vsel %vm917, %v1147, 0.0
        %1194 = vadd.xlane.f32.xlu0 %v1193
        %v1195 = vpop.xlane.xlu0 %1194
        %v1196 = vpack.c.bf16 %v1117, %v1117
        %v1197 = vpack.c.bf16 %v1119, %v1119
        %v1198 = vpack.c.bf16 %v1121, %v1121
        %v1199 = vpack.c.bf16 %v1123, %v1123
        %v1200 = vpack.c.bf16 %v1125, %v1125
        %v1201 = vpack.c.bf16 %v1127, %v1127
        %v1202 = vpack.c.bf16 %v1129, %v1129
        %v1203 = vpack.c.bf16 %v1131, %v1131
        %v1204 = vpack.c.bf16 %v1133, %v1133
        %v1205 = vpack.c.bf16 %v1135, %v1135
        %v1206 = vpack.c.bf16 %v1137, %v1137
        %v1207 = vpack.c.bf16 %v1139, %v1139
        %v1208 = vpack.c.bf16 %v1141, %v1141
        %v1209 = vpack.c.bf16 %v1143, %v1143
        %v1210 = vpack.c.bf16 %v1145, %v1145
        %v1211 = vpack.c.bf16 %v1147, %v1147
        %v1220 = vunpack.c.l.b16 %v1196
        %v1221 = vunpack.c.l.b16 %v1197
        %v1222 = vunpack.c.l.b16 %v1198
        %v1223 = vunpack.c.l.b16 %v1199
        %v1224 = vunpack.c.l.b16 %v1200
        %v1225 = vunpack.c.l.b16 %v1201
        %v1226 = vunpack.c.l.b16 %v1202
        %v1227 = vunpack.c.l.b16 %v1203
        %v1228 = vpack.c.b16 %v1221, %v1220
        %v1229 = vpack.c.b16 %v1223, %v1222
        %v1230 = vpack.c.b16 %v1225, %v1224
        %v1231 = vpack.c.b16 %v1227, %v1226
        %v1240 = vunpack.c.l.b16 %v865
        %v1241 = vunpack.c.l.b16 %v866
        %v1242 = vunpack.c.l.b16 %v867
        %v1243 = vunpack.c.l.b16 %v868
        %v1244 = vunpack.c.l.b16 %v869
        %v1245 = vunpack.c.l.b16 %v870
        %v1246 = vunpack.c.l.b16 %v871
        %v1247 = vunpack.c.l.b16 %v872
        %v1248 = vpack.c.b16 %v1241, %v1240
        %v1249 = vpack.c.b16 %v1243, %v1242
        %v1250 = vpack.c.b16 %v1245, %v1244
        %v1251 = vpack.c.b16 %v1247, %v1246
        %v1257 = vsel %vm917, %v1228, 0
        %v1260 = vsel %vm917, %v1229, 0
        %v1263 = vsel %vm917, %v1230, 0
        %v1266 = vsel %vm917, %v1231, 0
        %1268 = vmatpush.bf16.msra.mxu0 0
        %1269 = vmatpush.bf16.msra.mxu0 0
        %1270 = vmatpush.bf16.msra.mxu0 0
        %1271 = vmatpush.bf16.msra.mxu0 0
        %1272 = vmatpush.bf16.msra.mxu0 %v1251
        %1273 = vmatpush.bf16.msra.mxu0 %v1250
        %1274 = vmatpush.bf16.msra.mxu0 %v1249
        %1275 = vmatpush.bf16.msra.mxu0 %v1248
        %1276 = vmatmul.bf16.gmra.mxu0 %v1257
        %v1277 = vpop.f32.mrf.mxu0
        %v1278 = vadd.f32 0.0, %v1277
        %v1279 = vpop.f32.mrf.mxu0
        %v1280 = vadd.f32 0.0, %v1279
        %1281 = vmatmul.bf16.gmra.mxu0 %v1260
        %v1282 = vpop.f32.mrf.mxu0
        %v1283 = vadd.f32 0.0, %v1282
        %v1284 = vpop.f32.mrf.mxu0
        %v1285 = vadd.f32 0.0, %v1284
        %1286 = vmatmul.bf16.gmra.mxu0 %v1263
        %v1287 = vpop.f32.mrf.mxu0
        %v1288 = vadd.f32 0.0, %v1287
        %v1289 = vpop.f32.mrf.mxu0
        %v1290 = vadd.f32 0.0, %v1289
        %1291 = vmatmul.bf16.gmra.mxu0 %v1266
        %v1292 = vpop.f32.mrf.mxu0
        %v1293 = vadd.f32 0.0, %v1292
        %v1294 = vpop.f32.mrf.mxu0
        %v1295 = vadd.f32 0.0, %v1294
        %1296 = vdwg.mxu0
        %v1305 = vunpack.c.l.b16 %v1204
        %v1306 = vunpack.c.l.b16 %v1205
        %v1307 = vunpack.c.l.b16 %v1206
        %v1308 = vunpack.c.l.b16 %v1207
        %v1309 = vunpack.c.l.b16 %v1208
        %v1310 = vunpack.c.l.b16 %v1209
        %v1311 = vunpack.c.l.b16 %v1210
        %v1312 = vunpack.c.l.b16 %v1211
        %v1313 = vpack.c.b16 %v1306, %v1305
        %v1314 = vpack.c.b16 %v1308, %v1307
        %v1315 = vpack.c.b16 %v1310, %v1309
        %v1316 = vpack.c.b16 %v1312, %v1311
        %v1325 = vunpack.c.l.b16 %v873
        %v1326 = vunpack.c.l.b16 %v874
        %v1327 = vunpack.c.l.b16 %v875
        %v1328 = vunpack.c.l.b16 %v876
        %v1329 = vunpack.c.l.b16 %v877
        %v1330 = vunpack.c.l.b16 %v878
        %v1331 = vunpack.c.l.b16 %v879
        %v1332 = vunpack.c.l.b16 %v880
        %v1333 = vpack.c.b16 %v1326, %v1325
        %v1334 = vpack.c.b16 %v1328, %v1327
        %v1335 = vpack.c.b16 %v1330, %v1329
        %v1336 = vpack.c.b16 %v1332, %v1331
        %v1342 = vsel %vm917, %v1313, 0
        %v1345 = vsel %vm917, %v1314, 0
        %v1348 = vsel %vm917, %v1315, 0
        %v1351 = vsel %vm917, %v1316, 0
        %1353 = vmatpush.bf16.msra.mxu0 0
        %1354 = vmatpush.bf16.msra.mxu0 0
        %1355 = vmatpush.bf16.msra.mxu0 0
        %1356 = vmatpush.bf16.msra.mxu0 0
        %1357 = vmatpush.bf16.msra.mxu0 %v1336
        %1358 = vmatpush.bf16.msra.mxu0 %v1335
        %1359 = vmatpush.bf16.msra.mxu0 %v1334
        %1360 = vmatpush.bf16.msra.mxu0 %v1333
        %1361 = vmatmul.bf16.gmra.mxu0 %v1342
        %v1362 = vpop.f32.mrf.mxu0
        %v1363 = vadd.f32 0.0, %v1362
        %v1364 = vpop.f32.mrf.mxu0
        %v1365 = vadd.f32 0.0, %v1364
        %1366 = vmatmul.bf16.gmra.mxu0 %v1345
        %v1367 = vpop.f32.mrf.mxu0
        %v1368 = vadd.f32 0.0, %v1367
        %v1369 = vpop.f32.mrf.mxu0
        %v1370 = vadd.f32 0.0, %v1369
        %1371 = vmatmul.bf16.gmra.mxu0 %v1348
        %v1372 = vpop.f32.mrf.mxu0
        %v1373 = vadd.f32 0.0, %v1372
        %v1374 = vpop.f32.mrf.mxu0
        %v1375 = vadd.f32 0.0, %v1374
        %1376 = vmatmul.bf16.gmra.mxu0 %v1351
        %v1377 = vpop.f32.mrf.mxu0
        %v1378 = vadd.f32 0.0, %v1377
        %v1379 = vpop.f32.mrf.mxu0
        %v1380 = vadd.f32 0.0, %v1379
        %1381 = vdwg.mxu0
        %v1382 = vrcp.pop %v1150
        %v1383 = vrcp.pop %v1153
        %v1384 = vrcp.pop %v1156
        %v1385 = vrcp.pop %v1159
        %v1386 = vrcp.pop %v1162
        %v1387 = vrcp.pop %v1165
        %v1388 = vrcp.pop %v1168
        %v1389 = vrcp.pop %v1171
        %v1390 = vrcp.pop %v1174
        %v1391 = vrcp.pop %v1177
        %v1392 = vrcp.pop %v1180
        %v1393 = vrcp.pop %v1183
        %v1394 = vrcp.pop %v1186
        %v1395 = vrcp.pop %v1189
        %v1396 = vrcp.pop %v1192
        %v1397 = vrcp.pop %v1195
        %v1398 = vmul.f32 %v1278, %v1382
        %v1399 = vmul.f32 %v1280, %v1383
        %v1400 = vmul.f32 %v1283, %v1384
        %v1401 = vmul.f32 %v1285, %v1385
        %v1402 = vmul.f32 %v1288, %v1386
        %v1403 = vmul.f32 %v1290, %v1387
        %v1404 = vmul.f32 %v1293, %v1388
        %v1405 = vmul.f32 %v1295, %v1389
        %v1406 = vmul.f32 %v1363, %v1390
        %v1407 = vmul.f32 %v1365, %v1391
        %v1408 = vmul.f32 %v1368, %v1392
        %v1409 = vmul.f32 %v1370, %v1393
        %v1410 = vmul.f32 %v1373, %v1394
        %v1411 = vmul.f32 %v1375, %v1395
        %v1412 = vmul.f32 %v1378, %v1396
        %v1413 = vmul.f32 %v1380, %v1397
        %1414 = vst.msk [vmem:[%s191] sm:$0xff] %vm917, %v1398
        %1415 = vst.msk [vmem:[%s191 + $0x8] sm:$0xff] %vm917, %v1399
        %1416 = vst.msk [vmem:[%s191 + $0x10] sm:$0xff] %vm917, %v1400
        %1417 = vst.msk [vmem:[%s191 + $0x18] sm:$0xff] %vm917, %v1401
        %1418 = vst.msk [vmem:[%s191 + $0x20] sm:$0xff] %vm917, %v1402
        %1419 = vst.msk [vmem:[%s191 + $0x28] sm:$0xff] %vm917, %v1403
        %1420 = vst.msk [vmem:[%s191 + $0x30] sm:$0xff] %vm917, %v1404
        %1421 = vst.msk [vmem:[%s191 + $0x38] sm:$0xff] %vm917, %v1405
        %1422 = vst.msk [vmem:[%s191 + $0x40] sm:$0xff] %vm917, %v1406
        %1423 = vst.msk [vmem:[%s191 + $0x48] sm:$0xff] %vm917, %v1407
        %1424 = vst.msk [vmem:[%s191 + $0x50] sm:$0xff] %vm917, %v1408
        %1425 = vst.msk [vmem:[%s191 + $0x58] sm:$0xff] %vm917, %v1409
        %1426 = vst.msk [vmem:[%s191 + $0x60] sm:$0xff] %vm917, %v1410
        %1427 = vst.msk [vmem:[%s191 + $0x68] sm:$0xff] %vm917, %v1411
        %1428 = vst.msk [vmem:[%s191 + $0x70] sm:$0xff] %vm917, %v1412
        %1429 = vst.msk [vmem:[%s191 + $0x78] sm:$0xff] %vm917, %v1413
        %s1430 = sand.u32 %s96, 1
        %s1431 = scalar_lea.sflag [#allocation4], %s1430
        %s1432 = sand.u32 %s96, 1
        %s1433 = smul.addr %s1432, 128
        %s1434 = scalar_lea.vmem [#allocation5], %s1433
        // Predicated region
        $region37: #{head_forward.1} parent=31 // pred_check
          %p1435 = pneg %p106
        $region38: #{head_forward.1} parent=31 // pred_check_branch
          %1437 = sbr.rel (%p1435) target = $region40
        $region39: #{head_forward.1} parent=31 // pred_region
          %s1438 = smul.u32 2, %s20
          %1440 = vsyncadd %s1431, 0
          %s1441 = smul.addr %s1438, 8
          %s1442 = smul.addr %s1441, 8
          %s1443 = scalar_lea.hbm %s3, %s1442
          %s1444 = sshll.u32 %s1434, 4
          %s1445 = int_to_ptr.vmem [resolvable:$true] %s1444
          %s1446 = sshll.u32 %s1443, 4
          %s1447 = int_to_ptr.hbm [resolvable:$true] %s1446
          %1452 = dma.vmem_to_hbm [thread:$0]  %s1445, 2048, %s1447, %s1431, 128, 128, 8
        $region40: #{head_forward.1} parent=31 // pred_fallthru
          _
      $region32: #{head_forward.1} parent=5 // pred_fallthru
        _
      %p1453 = scmp.le.s32.totalorder 2, %s15
      // Predicated region
      $region41: #{head_forward.1} parent=5 // pred_check
        %p1454 = pneg %p1453
      $region42: #{head_forward.1} parent=5 // pred_check_branch
        %1456 = sbr.rel (%p1454) target = $region44
      $region43: #{head_forward.1} parent=5 // pred_region
        %s1457 = ssub.s32 %s15, 2
        // Predicated region
        $region45: #{head_forward.1} parent=43 // pred_check
          %p1458 = pneg %p112
        $region46: #{head_forward.1} parent=43 // pred_check_branch
          %1460 = sbr.rel (%p1458) target = $region48
        $region47: #{head_forward.1} parent=43 // pred_region
          %s1461 = sand.u32 %s97, 1
          %s1462 = scalar_lea.sflag [#allocation4], %s1461
          %s1463 = sand.u32 %s97, 1
          %s1464 = smul.addr %s1463, 128
          %s1465 = scalar_lea.vmem [#allocation5], %s1464
          %1467 = dma.done %s1462, 2048
        $region48: #{head_forward.1} parent=43 // pred_fallthru
          _
      $region44: #{head_forward.1} parent=5 // pred_fallthru
        _
    $region6: #{head_forward.1} parent=1 // loop_footer
      %s19 = sadd.s32 1, %s15
    $region7: #{head_forward.1} parent=1 // loop_footer_branch
      %14 = sbr.rel target = $region3
    $region8: #{head_forward.1} parent=1 // loop_exit
      _
    %1468 = vsyncpa [#allocation3], 1
    %s1469 = scalar_lea.sflag [#allocation3], 1
    %1470 = vsyncpa %s1469, 1
    %1471 = vsyncpa [#allocation4], 1
    %s1472 = scalar_lea.sflag [#allocation4], 1
    %1473 = vsyncpa %s1472, 1

</llo_original>
